<compile_context>
chip_gen: v5e
topology: v5e:2x2
jax: 0.10.0
libtpu: 0.0.40
codegen_flags: <defaults>
</compile_context>

<pallas_src>
import jax
import jax.numpy as jnp
from jax.experimental import pallas as pl
from jax.experimental.pallas import tpu as pltpu


def _round_up(n: int, m: int) -> int:
    return ((n + m - 1) // m) * m


def _num_tensorcores_per_chip() -> int:
    """Best-effort detection: v7x has 2 TensorCores/chip, v5e/v6e have 1."""
    try:
        kind = jax.devices()[0].device_kind.lower()
        if "v7" in kind or "7x" in kind:
            return 2
    except Exception:
        pass
    return 1


def _default_batch_tile(B: int, n_cores: int) -> int:
    """8-aligned batch tile. Single step on 1-TC chips for small/medium B;
    >= 2 steps on 2-TC chips; 2048-row tiles once B is very large."""
    B = max(B, 1)
    if n_cores >= 2:
        # At least two grid steps so both TensorCores get work.
        half = -(-B // 2)
        return min(_round_up(half, 8), 2048)
    if B <= 4096:
        return _round_up(B, 8)          # single step: no per-step overhead
    return 2048                          # amortize the ~0.35us/step overhead


def _regretnet_kernel(x_ref, a_ref,
                      w1_ref, b1_ref, w2_ref, b2_ref,
                      wh1_ref, wh2_ref, bh_ref,
                      wo_ref, bo_ref,
                      out_ref):
    cdtype = w1_ref.dtype   # bf16 (default) or f32; activations cast in-kernel

    # Branch 1: state_linear + tanh   (f32 accumulate, f32 elementwise)
    h1 = jnp.tanh(
        jnp.dot(x_ref[...].astype(cdtype), w1_ref[...],
                preferred_element_type=jnp.float32) + b1_ref[...])
    # Branch 2: action_linear + tanh
    h2 = jnp.tanh(
        jnp.dot(a_ref[...].astype(cdtype), w2_ref[...],
                preferred_element_type=jnp.float32) + b2_ref[...])

    # Hidden layer on the (implicit) concat:
    #   cat([h1, h2]) @ Wh == h1 @ Wh[:H1] + h2 @ Wh[H1:]   (exact)
    h = jnp.tanh(
        jnp.dot(h1.astype(cdtype), wh1_ref[...],
                preferred_element_type=jnp.float32)
        + jnp.dot(h2.astype(cdtype), wh2_ref[...],
                  preferred_element_type=jnp.float32)
        + bh_ref[...])

    # Output layer + abs, written at the true (unpadded) output width.
    out_ref[...] = jnp.abs(
        jnp.dot(h.astype(cdtype), wo_ref[...],
                preferred_element_type=jnp.float32) + bo_ref[...])


def prepare_params(params, *, use_bf16=True):
    """One-time parameter packing (call once, reuse across forward calls).

    Weights are stored (in, out) = PyTorch W^T, cast to the MXU compute dtype;
    biases stay f32 (added after the f32 accumulation) and are reshaped (1, n).
    linear_hidden's weight is pre-split into its state/action halves so the
    kernel never needs an in-kernel concat.
    """
    cdtype = jnp.bfloat16 if use_bf16 else jnp.float32
    h1 = params["w1"].shape[1]
    packed = {
        "w1": params["w1"].astype(cdtype),
        "w2": params["w2"].astype(cdtype),
        "wh1": params["wh"][:h1, :].astype(cdtype),
        "wh2": params["wh"][h1:, :].astype(cdtype),
        "wo": params["wo"].astype(cdtype),
        "b1": params["b1"].astype(jnp.float32).reshape(1, -1),
        "b2": params["b2"].astype(jnp.float32).reshape(1, -1),
        "bh": params["bh"].astype(jnp.float32).reshape(1, -1),
        "bo": params["bo"].astype(jnp.float32).reshape(1, -1),
    }
    return jax.tree_util.tree_map(jnp.asarray, packed)


def regretnet_forward(x, action, packed, *, batch_tile=None):
    """Fused RegretNet forward. x: (B, in1), action: (B, in2) -> (B, out_dim)."""
    B, in1 = x.shape
    in2 = action.shape[1]
    h1 = packed["w1"].shape[1]
    h2 = packed["w2"].shape[1]
    out_dim = packed["wo"].shape[1]

    # ---- batch tiling (generation-aware) ----
    if batch_tile is None:
        batch_tile = _default_batch_tile(B, _num_tensorcores_per_chip())
    assert batch_tile % 8 == 0, "batch_tile must be a multiple of 8 (sublane)"
    Bp = _round_up(B, batch_tile)
    if Bp != B:  # only pay the pad copy when the batch is ragged
        x = jnp.pad(x, ((0, Bp - B), (0, 0)))
        action = jnp.pad(action, ((0, Bp - B), (0, 0)))
    grid = (Bp // batch_tile,)

    def batch_spec(feat):
        return pl.BlockSpec((batch_tile, feat), lambda i: (i, 0))

    def resident_spec(arr):
        # Full-array block, constant index map -> stays VMEM-resident.
        return pl.BlockSpec(arr.shape, lambda i: (0, 0))

    wbytes = sum(int(packed[k].size) * packed[k].dtype.itemsize
                 for k in ("w1", "w2", "wh1", "wh2", "wo",
                           "b1", "b2", "bh", "bo"))
    cost = pl.CostEstimate(
        flops=2 * Bp * (in1 * h1 + in2 * h2 + (h1 + h2) * h1 + h1 * out_dim),
        transcendentals=Bp * (2 * h1 + h2),
        bytes_accessed=Bp * (in1 + in2 + out_dim) * 4 + wbytes,
    )

    y = pl.pallas_call(
        _regretnet_kernel,
        out_shape=jax.ShapeDtypeStruct((Bp, out_dim), jnp.float32),
        grid_spec=pltpu.PrefetchScalarGridSpec(
            num_scalar_prefetch=0,
            grid=grid,
            in_specs=[
                batch_spec(in1),                 # x
                batch_spec(in2),                 # action
                resident_spec(packed["w1"]), resident_spec(packed["b1"]),
                resident_spec(packed["w2"]), resident_spec(packed["b2"]),
                resident_spec(packed["wh1"]), resident_spec(packed["wh2"]),
                resident_spec(packed["bh"]),
                resident_spec(packed["wo"]), resident_spec(packed["bo"]),
            ],
            # Last block dim == full array dim (out_dim), so the narrow,
            # unpadded output block is legal; 32x less writeback than lane-padding.
            out_specs=pl.BlockSpec((batch_tile, out_dim), lambda i: (i, 0)),
        ),
        compiler_params=pltpu.CompilerParams(
            dimension_semantics=("parallel",),
        ),
        cost_estimate=cost,
    )(x, action,
      packed["w1"], packed["b1"], packed["w2"], packed["b2"],
      packed["wh1"], packed["wh2"], packed["bh"],
      packed["wo"], packed["bo"])

    return y[:B] if Bp != B else y


def init_params(key, input_dim, input_dim_2, hidden_dim, hidden_dim_2, output_dim):
    """Deterministic synthetic parameters. Weights stored (in, out) = PyTorch W^T."""
    ks = jax.random.split(key, 8)

    def lin(kw, kb, fan_in, fan_out):
        bound = 1.0 / jnp.sqrt(fan_in)
        w = jax.random.uniform(kw, (fan_in, fan_out), jnp.float32, -bound, bound)
        b = jax.random.uniform(kb, (fan_out,), jnp.float32, -bound, bound)
        return w, b

    w1, b1 = lin(ks[0], ks[1], input_dim, hidden_dim)
    w2, b2 = lin(ks[2], ks[3], input_dim_2, hidden_dim_2)
    wh, bh = lin(ks[4], ks[5], hidden_dim + hidden_dim_2, hidden_dim)
    wo, bo = lin(ks[6], ks[7], hidden_dim, output_dim)
    return {"w1": w1, "b1": b1, "w2": w2, "b2": b2,
            "wh": wh, "bh": bh, "wo": wo, "bo": bo}


def regretnet_reference(x, action, params):
    h1 = jnp.tanh(x @ params["w1"] + params["b1"])
    h2 = jnp.tanh(action @ params["w2"] + params["b2"])
    h = jnp.tanh(jnp.concatenate([h1, h2], axis=1) @ params["wh"] + params["bh"])
    return jnp.abs(h @ params["wo"] + params["bo"])


if __name__ == "__main__":
    # Small shapes consistent with the module's forward.
    B, input_dim, input_dim_2 = 256, 16, 8
    hidden_dim, hidden_dim_2, output_dim = 32, 16, 4

    key = jax.random.PRNGKey(0)
    k_x, k_a, k_p = jax.random.split(key, 3)

    x = jax.random.normal(k_x, (B, input_dim), jnp.float32)
    action = jax.random.normal(k_a, (B, input_dim_2), jnp.float32)
    params = init_params(k_p, input_dim, input_dim_2,
                         hidden_dim, hidden_dim_2, output_dim)
    y_ref = regretnet_reference(x, action, params)

    # 1) f32 path: bit-for-bit structural check against the reference.
    packed_f32 = prepare_params(params, use_bf16=False)
    y32 = jax.block_until_ready(regretnet_forward(x, action, packed_f32))
    assert y32.shape == (B, output_dim)
    assert jnp.allclose(y32, y_ref, atol=1e-5, rtol=1e-5)

    # 2) bf16-MXU path (default / fast): looser tolerance for bf16 operands.
    packed = prepare_params(params, use_bf16=True)
    y = jax.block_until_ready(regretnet_forward(x, action, packed))
    assert y.shape == (B, output_dim)
    assert jnp.allclose(y, y_ref, atol=5e-2, rtol=5e-2)

    print("KERNEL_OK")
</pallas_src>

<mosaic_0001>
module attributes {stable_mosaic.version = 11 : i64} {
  func.func @_regretnet_kernel(%arg0: i32, %arg1: memref<256x16xf32, #tpu.memory_space<vmem>>, %arg2: memref<256x8xf32, #tpu.memory_space<vmem>>, %arg3: memref<16x32xf32, #tpu.memory_space<vmem>>, %arg4: memref<1x32xf32, #tpu.memory_space<vmem>>, %arg5: memref<8x16xf32, #tpu.memory_space<vmem>>, %arg6: memref<1x16xf32, #tpu.memory_space<vmem>>, %arg7: memref<32x32xf32, #tpu.memory_space<vmem>>, %arg8: memref<16x32xf32, #tpu.memory_space<vmem>>, %arg9: memref<1x32xf32, #tpu.memory_space<vmem>>, %arg10: memref<32x4xf32, #tpu.memory_space<vmem>>, %arg11: memref<1x4xf32, #tpu.memory_space<vmem>>, %arg12: memref<256x4xf32, #tpu.memory_space<vmem>>) attributes {dimension_semantics = [#tpu.dimension_semantics<parallel>], iteration_bounds = array<i64: 1>, scalar_prefetch = 0 : i64, scratch_operands = 0 : i64, tpu.core_type = #tpu.core_type<tc>, window_params = [{transform_indices = @transform_0, window_bounds = array<i64: 256, 16>}, {transform_indices = @transform_1, window_bounds = array<i64: 256, 8>}, {pipeline_mode = #tpu.pipeline_mode<synchronous>, transform_indices = @transform_2, window_bounds = array<i64: 16, 32>}, {pipeline_mode = #tpu.pipeline_mode<synchronous>, transform_indices = @transform_3, window_bounds = array<i64: 1, 32>}, {pipeline_mode = #tpu.pipeline_mode<synchronous>, transform_indices = @transform_4, window_bounds = array<i64: 8, 16>}, {pipeline_mode = #tpu.pipeline_mode<synchronous>, transform_indices = @transform_5, window_bounds = array<i64: 1, 16>}, {pipeline_mode = #tpu.pipeline_mode<synchronous>, transform_indices = @transform_6, window_bounds = array<i64: 32, 32>}, {pipeline_mode = #tpu.pipeline_mode<synchronous>, transform_indices = @transform_7, window_bounds = array<i64: 16, 32>}, {pipeline_mode = #tpu.pipeline_mode<synchronous>, transform_indices = @transform_8, window_bounds = array<i64: 1, 32>}, {pipeline_mode = #tpu.pipeline_mode<synchronous>, transform_indices = @transform_9, window_bounds = array<i64: 32, 4>}, {pipeline_mode = #tpu.pipeline_mode<synchronous>, transform_indices = @transform_10, window_bounds = array<i64: 1, 4>}, {transform_indices = @transform_11, window_bounds = array<i64: 256, 4>}]} {
    %c0 = arith.constant 0 : index
    %c0_0 = arith.constant 0 : index
    %0 = vector.load %arg1[%c0, %c0_0] : memref<256x16xf32, #tpu.memory_space<vmem>>, vector<256x16xf32>
    %c0_1 = arith.constant 0 : index
    %c0_2 = arith.constant 0 : index
    %1 = vector.load %arg3[%c0_1, %c0_2] : memref<16x32xf32, #tpu.memory_space<vmem>>, vector<16x32xf32>
    %cst = arith.constant dense<0.000000e+00> : vector<256x32xf32>
    %2 = tpu.matmul %0, %1, %cst {dimension_numbers = #tpu.dot_dimension_numbers<[1], [0], [0], [1], [0, 0, 1, 1], [], []>} : vector<256x16xf32>, vector<16x32xf32>, vector<256x32xf32> -> vector<256x32xf32>
    %c0_3 = arith.constant 0 : index
    %c0_4 = arith.constant 0 : index
    %3 = vector.load %arg4[%c0_3, %c0_4] : memref<1x32xf32, #tpu.memory_space<vmem>>, vector<1x32xf32>
    %4 = vector.broadcast %3 : vector<1x32xf32> to vector<256x32xf32>
    %5 = arith.addf %2, %4 : vector<256x32xf32>
    %6 = math.tanh %5 : vector<256x32xf32>
    %c0_5 = arith.constant 0 : index
    %c0_6 = arith.constant 0 : index
    %7 = vector.load %arg2[%c0_5, %c0_6] : memref<256x8xf32, #tpu.memory_space<vmem>>, vector<256x8xf32>
    %c0_7 = arith.constant 0 : index
    %c0_8 = arith.constant 0 : index
    %8 = vector.load %arg5[%c0_7, %c0_8] : memref<8x16xf32, #tpu.memory_space<vmem>>, vector<8x16xf32>
    %cst_9 = arith.constant dense<0.000000e+00> : vector<256x16xf32>
    %9 = tpu.matmul %7, %8, %cst_9 {dimension_numbers = #tpu.dot_dimension_numbers<[1], [0], [0], [1], [0, 0, 1, 1], [], []>} : vector<256x8xf32>, vector<8x16xf32>, vector<256x16xf32> -> vector<256x16xf32>
    %c0_10 = arith.constant 0 : index
    %c0_11 = arith.constant 0 : index
    %10 = vector.load %arg6[%c0_10, %c0_11] : memref<1x16xf32, #tpu.memory_space<vmem>>, vector<1x16xf32>
    %11 = vector.broadcast %10 : vector<1x16xf32> to vector<256x16xf32>
    %12 = arith.addf %9, %11 : vector<256x16xf32>
    %13 = math.tanh %12 : vector<256x16xf32>
    %c0_12 = arith.constant 0 : index
    %c0_13 = arith.constant 0 : index
    %14 = vector.load %arg7[%c0_12, %c0_13] : memref<32x32xf32, #tpu.memory_space<vmem>>, vector<32x32xf32>
    %cst_14 = arith.constant dense<0.000000e+00> : vector<256x32xf32>
    %15 = tpu.matmul %6, %14, %cst_14 {dimension_numbers = #tpu.dot_dimension_numbers<[1], [0], [0], [1], [0, 0, 1, 1], [], []>} : vector<256x32xf32>, vector<32x32xf32>, vector<256x32xf32> -> vector<256x32xf32>
    %c0_15 = arith.constant 0 : index
    %c0_16 = arith.constant 0 : index
    %16 = vector.load %arg8[%c0_15, %c0_16] : memref<16x32xf32, #tpu.memory_space<vmem>>, vector<16x32xf32>
    %cst_17 = arith.constant dense<0.000000e+00> : vector<256x32xf32>
    %17 = tpu.matmul %13, %16, %cst_17 {dimension_numbers = #tpu.dot_dimension_numbers<[1], [0], [0], [1], [0, 0, 1, 1], [], []>} : vector<256x16xf32>, vector<16x32xf32>, vector<256x32xf32> -> vector<256x32xf32>
    %18 = arith.addf %15, %17 : vector<256x32xf32>
    %c0_18 = arith.constant 0 : index
    %c0_19 = arith.constant 0 : index
    %19 = vector.load %arg9[%c0_18, %c0_19] : memref<1x32xf32, #tpu.memory_space<vmem>>, vector<1x32xf32>
    %20 = vector.broadcast %19 : vector<1x32xf32> to vector<256x32xf32>
    %21 = arith.addf %18, %20 : vector<256x32xf32>
    %22 = math.tanh %21 : vector<256x32xf32>
    %c0_20 = arith.constant 0 : index
    %c0_21 = arith.constant 0 : index
    %23 = vector.load %arg10[%c0_20, %c0_21] : memref<32x4xf32, #tpu.memory_space<vmem>>, vector<32x4xf32>
    %cst_22 = arith.constant dense<0.000000e+00> : vector<256x4xf32>
    %24 = tpu.matmul %22, %23, %cst_22 {dimension_numbers = #tpu.dot_dimension_numbers<[1], [0], [0], [1], [0, 0, 1, 1], [], []>} : vector<256x32xf32>, vector<32x4xf32>, vector<256x4xf32> -> vector<256x4xf32>
    %c0_23 = arith.constant 0 : index
    %c0_24 = arith.constant 0 : index
    %25 = vector.load %arg11[%c0_23, %c0_24] : memref<1x4xf32, #tpu.memory_space<vmem>>, vector<1x4xf32>
    %26 = vector.broadcast %25 : vector<1x4xf32> to vector<256x4xf32>
    %27 = arith.addf %24, %26 : vector<256x4xf32>
    %28 = math.absf %27 : vector<256x4xf32>
    %c0_25 = arith.constant 0 : index
    %c0_26 = arith.constant 0 : index
    %29 = vector.load %arg12[%c0_25, %c0_26] : memref<256x4xf32, #tpu.memory_space<vmem>>, vector<256x4xf32>
    tpu.vector_store %arg12[%c0_25, %c0_26], %28 {strides = array<i32>} : memref<256x4xf32, #tpu.memory_space<vmem>>, vector<256x4xf32>,
    return
  }
  func.func @transform_0(%arg0: i32) -> (i32, i32) {
    %c0_i32 = arith.constant 0 : i32
    %c0_i32_0 = arith.constant 0 : i32
    return %arg0, %c0_i32 : i32, i32
  }
  func.func @transform_1(%arg0: i32) -> (i32, i32) {
    %c0_i32 = arith.constant 0 : i32
    %c0_i32_0 = arith.constant 0 : i32
    return %arg0, %c0_i32 : i32, i32
  }
  func.func @transform_2(%arg0: i32) -> (i32, i32) {
    %c0_i32 = arith.constant 0 : i32
    %c0_i32_0 = arith.constant 0 : i32
    %c0_i32_1 = arith.constant 0 : i32
    return %c0_i32, %c0_i32_0 : i32, i32
  }
  func.func @transform_3(%arg0: i32) -> (i32, i32) {
    %c0_i32 = arith.constant 0 : i32
    %c0_i32_0 = arith.constant 0 : i32
    %c0_i32_1 = arith.constant 0 : i32
    return %c0_i32, %c0_i32_0 : i32, i32
  }
  func.func @transform_4(%arg0: i32) -> (i32, i32) {
    %c0_i32 = arith.constant 0 : i32
    %c0_i32_0 = arith.constant 0 : i32
    %c0_i32_1 = arith.constant 0 : i32
    return %c0_i32, %c0_i32_0 : i32, i32
  }
  func.func @transform_5(%arg0: i32) -> (i32, i32) {
    %c0_i32 = arith.constant 0 : i32
    %c0_i32_0 = arith.constant 0 : i32
    %c0_i32_1 = arith.constant 0 : i32
    return %c0_i32, %c0_i32_0 : i32, i32
  }
  func.func @transform_6(%arg0: i32) -> (i32, i32) {
    %c0_i32 = arith.constant 0 : i32
    %c0_i32_0 = arith.constant 0 : i32
    %c0_i32_1 = arith.constant 0 : i32
    return %c0_i32, %c0_i32_0 : i32, i32
  }
  func.func @transform_7(%arg0: i32) -> (i32, i32) {
    %c0_i32 = arith.constant 0 : i32
    %c0_i32_0 = arith.constant 0 : i32
    %c0_i32_1 = arith.constant 0 : i32
    return %c0_i32, %c0_i32_0 : i32, i32
  }
  func.func @transform_8(%arg0: i32) -> (i32, i32) {
    %c0_i32 = arith.constant 0 : i32
    %c0_i32_0 = arith.constant 0 : i32
    %c0_i32_1 = arith.constant 0 : i32
    return %c0_i32, %c0_i32_0 : i32, i32
  }
  func.func @transform_9(%arg0: i32) -> (i32, i32) {
    %c0_i32 = arith.constant 0 : i32
    %c0_i32_0 = arith.constant 0 : i32
    %c0_i32_1 = arith.constant 0 : i32
    return %c0_i32, %c0_i32_0 : i32, i32
  }
  func.func @transform_10(%arg0: i32) -> (i32, i32) {
    %c0_i32 = arith.constant 0 : i32
    %c0_i32_0 = arith.constant 0 : i32
    %c0_i32_1 = arith.constant 0 : i32
    return %c0_i32, %c0_i32_0 : i32, i32
  }
  func.func @transform_11(%arg0: i32) -> (i32, i32) {
    %c0_i32 = arith.constant 0 : i32
    %c0_i32_0 = arith.constant 0 : i32
    return %arg0, %c0_i32 : i32, i32
  }
}

</mosaic_0001>

<llo_original>
// kernel: tpu_custom_call.1
$region0: #{tpu_custom_call.1}
  #allocation0 [shape = 'u32[]', space=smem, size = 0x4, offset = 0x4, fixed_abs, tag = 'smem constant byte address 0x4 - core index']
  #allocation1 [shape = 'u32[72,128]{1,0:T(1,128)}', space=vmem, size = 0x9000, scoped, tag = 'internal scratch']
  %s0 = inlined_call_operand.vmem [shape: f32[256,16], index: 0, kind: input, shape index: {}]
  %s1 = inlined_call_operand.vmem [shape: f32[256,8], index: 1, kind: input, shape index: {}]
  %s2 = inlined_call_operand.vmem [shape: f32[16,32], index: 2, kind: input, shape index: {}]
  %s3 = inlined_call_operand.vmem [shape: f32[1,32], index: 3, kind: input, shape index: {}]
  %s4 = inlined_call_operand.vmem [shape: f32[8,16], index: 4, kind: input, shape index: {}]
  %s5 = inlined_call_operand.vmem [shape: f32[1,16], index: 5, kind: input, shape index: {}]
  %s6 = inlined_call_operand.vmem [shape: f32[32,32], index: 6, kind: input, shape index: {}]
  %s7 = inlined_call_operand.vmem [shape: f32[16,32], index: 7, kind: input, shape index: {}]
  %s8 = inlined_call_operand.vmem [shape: f32[1,32], index: 8, kind: input, shape index: {}]
  %s9 = inlined_call_operand.vmem [shape: f32[32,4], index: 9, kind: input, shape index: {}]
  %s10 = inlined_call_operand.vmem [shape: f32[1,4], index: 10, kind: input, shape index: {}]
  %s11 = inlined_call_operand.vmem [shape: f32[256,4], index: 11, kind: output, shape index: {}]
  %s12 = sld [smem:[#allocation0]]
  $region54: #{tpu_custom_call.1} parent=0
    _
  %s14 = ssub.s32 1, %s12
  %s15 = scalar_select 0, %s14, %s12
  // Predicated region
  $region2: #{tpu_custom_call.1} parent=0 // pred_check
    _
  $region3: #{tpu_custom_call.1} parent=0 // pred_check_branch
    %17 = sbr.rel (0) target = $region5
  $region4: #{tpu_custom_call.1} parent=0 // pred_region
    _
  $region5: #{tpu_custom_call.1} parent=0 // pred_fallthru
    _
  // Predicated region
  $region6: #{tpu_custom_call.1} parent=0 // pred_check
    _
  $region7: #{tpu_custom_call.1} parent=0 // pred_check_branch
    %19 = sbr.rel (0) target = $region9
  $region8: #{tpu_custom_call.1} parent=0 // pred_region
    _
  $region9: #{tpu_custom_call.1} parent=0 // pred_fallthru
    _
  // Predicated region
  $region10: #{tpu_custom_call.1} parent=0 // pred_check
    _
  $region11: #{tpu_custom_call.1} parent=0 // pred_check_branch
    %21 = sbr.rel (0) target = $region13
  $region12: #{tpu_custom_call.1} parent=0 // pred_region
    _
  $region13: #{tpu_custom_call.1} parent=0 // pred_fallthru
    _
  // Predicated region
  $region14: #{tpu_custom_call.1} parent=0 // pred_check
    _
  $region15: #{tpu_custom_call.1} parent=0 // pred_check_branch
    %23 = sbr.rel (0) target = $region17
  $region16: #{tpu_custom_call.1} parent=0 // pred_region
    _
  $region17: #{tpu_custom_call.1} parent=0 // pred_fallthru
    _
  // Predicated region
  $region18: #{tpu_custom_call.1} parent=0 // pred_check
    _
  $region19: #{tpu_custom_call.1} parent=0 // pred_check_branch
    %25 = sbr.rel (0) target = $region21
  $region20: #{tpu_custom_call.1} parent=0 // pred_region
    _
  $region21: #{tpu_custom_call.1} parent=0 // pred_fallthru
    _
  // Predicated region
  $region22: #{tpu_custom_call.1} parent=0 // pred_check
    _
  $region23: #{tpu_custom_call.1} parent=0 // pred_check_branch
    %27 = sbr.rel (0) target = $region25
  $region24: #{tpu_custom_call.1} parent=0 // pred_region
    _
  $region25: #{tpu_custom_call.1} parent=0 // pred_fallthru
    _
  // Predicated region
  $region26: #{tpu_custom_call.1} parent=0 // pred_check
    _
  $region27: #{tpu_custom_call.1} parent=0 // pred_check_branch
    %29 = sbr.rel (0) target = $region29
  $region28: #{tpu_custom_call.1} parent=0 // pred_region
    _
  $region29: #{tpu_custom_call.1} parent=0 // pred_fallthru
    _
  // Predicated region
  $region30: #{tpu_custom_call.1} parent=0 // pred_check
    _
  $region31: #{tpu_custom_call.1} parent=0 // pred_check_branch
    %31 = sbr.rel (0) target = $region33
  $region32: #{tpu_custom_call.1} parent=0 // pred_region
    _
  $region33: #{tpu_custom_call.1} parent=0 // pred_fallthru
    _
  // Predicated region
  $region34: #{tpu_custom_call.1} parent=0 // pred_check
    _
  $region35: #{tpu_custom_call.1} parent=0 // pred_check_branch
    %33 = sbr.rel (0) target = $region37
  $region36: #{tpu_custom_call.1} parent=0 // pred_region
    _
  $region37: #{tpu_custom_call.1} parent=0 // pred_fallthru
    _
  // Predicated region
  $region38: #{tpu_custom_call.1} parent=0 // pred_check
    _
  $region39: #{tpu_custom_call.1} parent=0 // pred_check_branch
    %35 = sbr.rel (0) target = $region41
  $region40: #{tpu_custom_call.1} parent=0 // pred_region
    _
  $region41: #{tpu_custom_call.1} parent=0 // pred_fallthru
    _
  // Predicated region
  $region42: #{tpu_custom_call.1} parent=0 // pred_check
    _
  $region43: #{tpu_custom_call.1} parent=0 // pred_check_branch
    %37 = sbr.rel (0) target = $region45
  $region44: #{tpu_custom_call.1} parent=0 // pred_region
    _
  $region45: #{tpu_custom_call.1} parent=0 // pred_fallthru
    _
  %v38 = vld [vmem:[%s0] sm:$0xff]
  %v39 = vld [vmem:[%s0 + $0x8] sm:$0xff]
  %v40 = vld [vmem:[%s0 + $0x10] sm:$0xff]
  %v41 = vld [vmem:[%s0 + $0x18] sm:$0xff]
  %v42 = vld [vmem:[%s0 + $0x20] sm:$0xff]
  %v43 = vld [vmem:[%s0 + $0x28] sm:$0xff]
  %v44 = vld [vmem:[%s0 + $0x30] sm:$0xff]
  %v45 = vld [vmem:[%s0 + $0x38] sm:$0xff]
  %v46 = vld [vmem:[%s0 + $0x40] sm:$0xff]
  %v47 = vld [vmem:[%s0 + $0x48] sm:$0xff]
  %v48 = vld [vmem:[%s0 + $0x50] sm:$0xff]
  %v49 = vld [vmem:[%s0 + $0x58] sm:$0xff]
  %v50 = vld [vmem:[%s0 + $0x60] sm:$0xff]
  %v51 = vld [vmem:[%s0 + $0x68] sm:$0xff]
  %v52 = vld [vmem:[%s0 + $0x70] sm:$0xff]
  %v53 = vld [vmem:[%s0 + $0x78] sm:$0xff]
  %v54 = vld [vmem:[%s0 + $0x80] sm:$0xff]
  %v55 = vld [vmem:[%s0 + $0x88] sm:$0xff]
  %v56 = vld [vmem:[%s0 + $0x90] sm:$0xff]
  %v57 = vld [vmem:[%s0 + $0x98] sm:$0xff]
  %v58 = vld [vmem:[%s0 + $0xa0] sm:$0xff]
  %v59 = vld [vmem:[%s0 + $0xa8] sm:$0xff]
  %v60 = vld [vmem:[%s0 + $0xb0] sm:$0xff]
  %v61 = vld [vmem:[%s0 + $0xb8] sm:$0xff]
  %v62 = vld [vmem:[%s0 + $0xc0] sm:$0xff]
  %v63 = vld [vmem:[%s0 + $0xc8] sm:$0xff]
  %v64 = vld [vmem:[%s0 + $0xd0] sm:$0xff]
  %v65 = vld [vmem:[%s0 + $0xd8] sm:$0xff]
  %v66 = vld [vmem:[%s0 + $0xe0] sm:$0xff]
  %v67 = vld [vmem:[%s0 + $0xe8] sm:$0xff]
  %v68 = vld [vmem:[%s0 + $0xf0] sm:$0xff]
  %v69 = vld [vmem:[%s0 + $0xf8] sm:$0xff]
  %v70 = vld [vmem:[%s2] sm:$0xff]
  %v71 = vld [vmem:[%s2 + $0x8] sm:$0xff]
  %v72 = vld [vmem:[%s3] sm:$0x1]
  %v74 = vperm.slane %v72, 0
  %vm76 = vcmask 130048
  %v78 = vsel %vm76, %v38, 0
  %v81 = vsel %vm76, %v39, 0
  %v84 = vsel %vm76, %v40, 0
  %v87 = vsel %vm76, %v41, 0
  %v90 = vsel %vm76, %v42, 0
  %v93 = vsel %vm76, %v43, 0
  %v96 = vsel %vm76, %v44, 0
  %v99 = vsel %vm76, %v45, 0
  %v102 = vsel %vm76, %v46, 0
  %v105 = vsel %vm76, %v47, 0
  %v108 = vsel %vm76, %v48, 0
  %v111 = vsel %vm76, %v49, 0
  %v114 = vsel %vm76, %v50, 0
  %v117 = vsel %vm76, %v51, 0
  %v120 = vsel %vm76, %v52, 0
  %v123 = vsel %vm76, %v53, 0
  %v126 = vsel %vm76, %v54, 0
  %v129 = vsel %vm76, %v55, 0
  %v132 = vsel %vm76, %v56, 0
  %v135 = vsel %vm76, %v57, 0
  %v138 = vsel %vm76, %v58, 0
  %v141 = vsel %vm76, %v59, 0
  %v144 = vsel %vm76, %v60, 0
  %v147 = vsel %vm76, %v61, 0
  %v150 = vsel %vm76, %v62, 0
  %v153 = vsel %vm76, %v63, 0
  %v156 = vsel %vm76, %v64, 0
  %v159 = vsel %vm76, %v65, 0
  %v162 = vsel %vm76, %v66, 0
  %v165 = vsel %vm76, %v67, 0
  %v168 = vsel %vm76, %v68, 0
  %v171 = vsel %vm76, %v69, 0
  %173 = vmatpush.msra.mxu0 0.0
  %174 = vmatpush.msra.mxu0 0.0
  %175 = vmatpush.msra.mxu0 0.0
  %176 = vmatpush.msra.mxu0 0.0
  %177 = vmatpush.msra.mxu0 0.0
  %178 = vmatpush.msra.mxu0 0.0
  %179 = vmatpush.msra.mxu0 0.0
  %180 = vmatpush.msra.mxu0 0.0
  %181 = vmatpush.msra.mxu0 0.0
  %182 = vmatpush.msra.mxu0 0.0
  %183 = vmatpush.msra.mxu0 0.0
  %184 = vmatpush.msra.mxu0 0.0
  %185 = vmatpush.msra.mxu0 0.0
  %186 = vmatpush.msra.mxu0 0.0
  %187 = vmatpush.msra.mxu0 %v71
  %188 = vmatpush.msra.mxu0 %v70
  %189 = vmatmul.f32.gmra.mxu0 %v78
  %v190 = vpop.f32.mrf.mxu0
  %v191 = vadd.f32 %v74, %v190
  %192 = vmatmul.f32.gmra.mxu0 %v81
  %v193 = vpop.f32.mrf.mxu0
  %v194 = vadd.f32 %v74, %v193
  %195 = vmatmul.f32.gmra.mxu0 %v84
  %v196 = vpop.f32.mrf.mxu0
  %v197 = vadd.f32 %v74, %v196
  %198 = vmatmul.f32.gmra.mxu0 %v87
  %v199 = vpop.f32.mrf.mxu0
  %v200 = vadd.f32 %v74, %v199
  %201 = vmatmul.f32.gmra.mxu0 %v90
  %v202 = vpop.f32.mrf.mxu0
  %v203 = vadd.f32 %v74, %v202
  %204 = vmatmul.f32.gmra.mxu0 %v93
  %v205 = vpop.f32.mrf.mxu0
  %v206 = vadd.f32 %v74, %v205
  %207 = vmatmul.f32.gmra.mxu0 %v96
  %v208 = vpop.f32.mrf.mxu0
  %v209 = vadd.f32 %v74, %v208
  %210 = vmatmul.f32.gmra.mxu0 %v99
  %v211 = vpop.f32.mrf.mxu0
  %v212 = vadd.f32 %v74, %v211
  %213 = vmatmul.f32.gmra.mxu0 %v102
  %v214 = vpop.f32.mrf.mxu0
  %v215 = vadd.f32 %v74, %v214
  %216 = vmatmul.f32.gmra.mxu0 %v105
  %v217 = vpop.f32.mrf.mxu0
  %v218 = vadd.f32 %v74, %v217
  %219 = vmatmul.f32.gmra.mxu0 %v108
  %v220 = vpop.f32.mrf.mxu0
  %v221 = vadd.f32 %v74, %v220
  %222 = vmatmul.f32.gmra.mxu0 %v111
  %v223 = vpop.f32.mrf.mxu0
  %v224 = vadd.f32 %v74, %v223
  %225 = vmatmul.f32.gmra.mxu0 %v114
  %v226 = vpop.f32.mrf.mxu0
  %v227 = vadd.f32 %v74, %v226
  %228 = vmatmul.f32.gmra.mxu0 %v117
  %v229 = vpop.f32.mrf.mxu0
  %v230 = vadd.f32 %v74, %v229
  %231 = vmatmul.f32.gmra.mxu0 %v120
  %v232 = vpop.f32.mrf.mxu0
  %v233 = vadd.f32 %v74, %v232
  %234 = vmatmul.f32.gmra.mxu0 %v123
  %v235 = vpop.f32.mrf.mxu0
  %v236 = vadd.f32 %v74, %v235
  %237 = vmatmul.f32.gmra.mxu0 %v126
  %v238 = vpop.f32.mrf.mxu0
  %v239 = vadd.f32 %v74, %v238
  %240 = vmatmul.f32.gmra.mxu0 %v129
  %v241 = vpop.f32.mrf.mxu0
  %v242 = vadd.f32 %v74, %v241
  %243 = vmatmul.f32.gmra.mxu0 %v132
  %v244 = vpop.f32.mrf.mxu0
  %v245 = vadd.f32 %v74, %v244
  %246 = vmatmul.f32.gmra.mxu0 %v135
  %v247 = vpop.f32.mrf.mxu0
  %v248 = vadd.f32 %v74, %v247
  %249 = vmatmul.f32.gmra.mxu0 %v138
  %v250 = vpop.f32.mrf.mxu0
  %v251 = vadd.f32 %v74, %v250
  %252 = vmatmul.f32.gmra.mxu0 %v141
  %v253 = vpop.f32.mrf.mxu0
  %v254 = vadd.f32 %v74, %v253
  %255 = vmatmul.f32.gmra.mxu0 %v144
  %v256 = vpop.f32.mrf.mxu0
  %v257 = vadd.f32 %v74, %v256
  %258 = vmatmul.f32.gmra.mxu0 %v147
  %v259 = vpop.f32.mrf.mxu0
  %v260 = vadd.f32 %v74, %v259
  %261 = vmatmul.f32.gmra.mxu0 %v150
  %v262 = vpop.f32.mrf.mxu0
  %v263 = vadd.f32 %v74, %v262
  %264 = vmatmul.f32.gmra.mxu0 %v153
  %v265 = vpop.f32.mrf.mxu0
  %v266 = vadd.f32 %v74, %v265
  %267 = vmatmul.f32.gmra.mxu0 %v156
  %v268 = vpop.f32.mrf.mxu0
  %v269 = vadd.f32 %v74, %v268
  %270 = vmatmul.f32.gmra.mxu0 %v159
  %v271 = vpop.f32.mrf.mxu0
  %v272 = vadd.f32 %v74, %v271
  %273 = vmatmul.f32.gmra.mxu0 %v162
  %v274 = vpop.f32.mrf.mxu0
  %v275 = vadd.f32 %v74, %v274
  %276 = vmatmul.f32.gmra.mxu0 %v165
  %v277 = vpop.f32.mrf.mxu0
  %v278 = vadd.f32 %v74, %v277
  %279 = vmatmul.f32.gmra.mxu0 %v168
  %v280 = vpop.f32.mrf.mxu0
  %v281 = vadd.f32 %v74, %v280
  %282 = vmatmul.f32.gmra.mxu0 %v171
  %v283 = vpop.f32.mrf.mxu0
  %v284 = vadd.f32 %v74, %v283
  %285 = vdwg.mxu0
  %v286 = vtanh.pop %v191
  %v287 = vtanh.pop %v194
  %v288 = vtanh.pop %v197
  %v289 = vtanh.pop %v200
  %v290 = vtanh.pop %v203
  %v291 = vtanh.pop %v206
  %v292 = vtanh.pop %v209
  %v293 = vtanh.pop %v212
  %v294 = vtanh.pop %v215
  %v295 = vtanh.pop %v218
  %v296 = vtanh.pop %v221
  %v297 = vtanh.pop %v224
  %v298 = vtanh.pop %v227
  %v299 = vtanh.pop %v230
  %v300 = vtanh.pop %v233
  %v301 = vtanh.pop %v236
  %v302 = vtanh.pop %v239
  %v303 = vtanh.pop %v242
  %v304 = vtanh.pop %v245
  %v305 = vtanh.pop %v248
  %v306 = vtanh.pop %v251
  %v307 = vtanh.pop %v254
  %v308 = vtanh.pop %v257
  %v309 = vtanh.pop %v260
  %v310 = vtanh.pop %v263
  %v311 = vtanh.pop %v266
  %v312 = vtanh.pop %v269
  %v313 = vtanh.pop %v272
  %v314 = vtanh.pop %v275
  %v315 = vtanh.pop %v278
  %v316 = vtanh.pop %v281
  %v317 = vtanh.pop %v284
  %v318 = vld [vmem:[%s1] sm:$0xff]
  %v319 = vld [vmem:[%s1 + $0x8] sm:$0xff]
  %v320 = vld [vmem:[%s1 + $0x10] sm:$0xff]
  %v321 = vld [vmem:[%s1 + $0x18] sm:$0xff]
  %v322 = vld [vmem:[%s1 + $0x20] sm:$0xff]
  %v323 = vld [vmem:[%s1 + $0x28] sm:$0xff]
  %v324 = vld [vmem:[%s1 + $0x30] sm:$0xff]
  %v325 = vld [vmem:[%s1 + $0x38] sm:$0xff]
  %v326 = vld [vmem:[%s1 + $0x40] sm:$0xff]
  %v327 = vld [vmem:[%s1 + $0x48] sm:$0xff]
  %v328 = vld [vmem:[%s1 + $0x50] sm:$0xff]
  %v329 = vld [vmem:[%s1 + $0x58] sm:$0xff]
  %v330 = vld [vmem:[%s1 + $0x60] sm:$0xff]
  %v331 = vld [vmem:[%s1 + $0x68] sm:$0xff]
  %v332 = vld [vmem:[%s1 + $0x70] sm:$0xff]
  %v333 = vld [vmem:[%s1 + $0x78] sm:$0xff]
  %v334 = vld [vmem:[%s1 + $0x80] sm:$0xff]
  %v335 = vld [vmem:[%s1 + $0x88] sm:$0xff]
  %v336 = vld [vmem:[%s1 + $0x90] sm:$0xff]
  %v337 = vld [vmem:[%s1 + $0x98] sm:$0xff]
  %v338 = vld [vmem:[%s1 + $0xa0] sm:$0xff]
  %v339 = vld [vmem:[%s1 + $0xa8] sm:$0xff]
  %v340 = vld [vmem:[%s1 + $0xb0] sm:$0xff]
  %v341 = vld [vmem:[%s1 + $0xb8] sm:$0xff]
  %v342 = vld [vmem:[%s1 + $0xc0] sm:$0xff]
  %v343 = vld [vmem:[%s1 + $0xc8] sm:$0xff]
  %v344 = vld [vmem:[%s1 + $0xd0] sm:$0xff]
  %v345 = vld [vmem:[%s1 + $0xd8] sm:$0xff]
  %v346 = vld [vmem:[%s1 + $0xe0] sm:$0xff]
  %v347 = vld [vmem:[%s1 + $0xe8] sm:$0xff]
  %v348 = vld [vmem:[%s1 + $0xf0] sm:$0xff]
  %v349 = vld [vmem:[%s1 + $0xf8] sm:$0xff]
  %v350 = vld [vmem:[%s4] sm:$0xff]
  %v351 = vld [vmem:[%s5] sm:$0x1]
  %v353 = vperm.slane %v351, 0
  %vm355 = vcmask 64512
  %v357 = vsel %vm355, %v318, 0
  %v360 = vsel %vm355, %v319, 0
  %v363 = vsel %vm355, %v320, 0
  %v366 = vsel %vm355, %v321, 0
  %v369 = vsel %vm355, %v322, 0
  %v372 = vsel %vm355, %v323, 0
  %v375 = vsel %vm355, %v324, 0
  %v378 = vsel %vm355, %v325, 0
  %v381 = vsel %vm355, %v326, 0
  %v384 = vsel %vm355, %v327, 0
  %v387 = vsel %vm355, %v328, 0
  %v390 = vsel %vm355, %v329, 0
  %v393 = vsel %vm355, %v330, 0
  %v396 = vsel %vm355, %v331, 0
  %v399 = vsel %vm355, %v332, 0
  %v402 = vsel %vm355, %v333, 0
  %v405 = vsel %vm355, %v334, 0
  %v408 = vsel %vm355, %v335, 0
  %v411 = vsel %vm355, %v336, 0
  %v414 = vsel %vm355, %v337, 0
  %v417 = vsel %vm355, %v338, 0
  %v420 = vsel %vm355, %v339, 0
  %v423 = vsel %vm355, %v340, 0
  %v426 = vsel %vm355, %v341, 0
  %v429 = vsel %vm355, %v342, 0
  %v432 = vsel %vm355, %v343, 0
  %v435 = vsel %vm355, %v344, 0
  %v438 = vsel %vm355, %v345, 0
  %v441 = vsel %vm355, %v346, 0
  %v444 = vsel %vm355, %v347, 0
  %v447 = vsel %vm355, %v348, 0
  %v450 = vsel %vm355, %v349, 0
  %452 = vmatpush.msra.mxu0 0.0
  %453 = vmatpush.msra.mxu0 0.0
  %454 = vmatpush.msra.mxu0 0.0
  %455 = vmatpush.msra.mxu0 0.0
  %456 = vmatpush.msra.mxu0 0.0
  %457 = vmatpush.msra.mxu0 0.0
  %458 = vmatpush.msra.mxu0 0.0
  %459 = vmatpush.msra.mxu0 0.0
  %460 = vmatpush.msra.mxu0 0.0
  %461 = vmatpush.msra.mxu0 0.0
  %462 = vmatpush.msra.mxu0 0.0
  %463 = vmatpush.msra.mxu0 0.0
  %464 = vmatpush.msra.mxu0 0.0
  %465 = vmatpush.msra.mxu0 0.0
  %466 = vmatpush.msra.mxu0 0.0
  %467 = vmatpush.msra.mxu0 %v350
  %468 = vmatmul.f32.gmra.mxu0 %v357
  %v469 = vpop.f32.mrf.mxu0
  %v470 = vadd.f32 %v353, %v469
  %471 = vmatmul.f32.gmra.mxu0 %v360
  %v472 = vpop.f32.mrf.mxu0
  %v473 = vadd.f32 %v353, %v472
  %474 = vmatmul.f32.gmra.mxu0 %v363
  %v475 = vpop.f32.mrf.mxu0
  %v476 = vadd.f32 %v353, %v475
  %477 = vmatmul.f32.gmra.mxu0 %v366
  %v478 = vpop.f32.mrf.mxu0
  %v479 = vadd.f32 %v353, %v478
  %480 = vmatmul.f32.gmra.mxu0 %v369
  %v481 = vpop.f32.mrf.mxu0
  %v482 = vadd.f32 %v353, %v481
  %483 = vmatmul.f32.gmra.mxu0 %v372
  %v484 = vpop.f32.mrf.mxu0
  %v485 = vadd.f32 %v353, %v484
  %486 = vmatmul.f32.gmra.mxu0 %v375
  %v487 = vpop.f32.mrf.mxu0
  %v488 = vadd.f32 %v353, %v487
  %489 = vmatmul.f32.gmra.mxu0 %v378
  %v490 = vpop.f32.mrf.mxu0
  %v491 = vadd.f32 %v353, %v490
  %492 = vmatmul.f32.gmra.mxu0 %v381
  %v493 = vpop.f32.mrf.mxu0
  %v494 = vadd.f32 %v353, %v493
  %495 = vmatmul.f32.gmra.mxu0 %v384
  %v496 = vpop.f32.mrf.mxu0
  %v497 = vadd.f32 %v353, %v496
  %498 = vmatmul.f32.gmra.mxu0 %v387
  %v499 = vpop.f32.mrf.mxu0
  %v500 = vadd.f32 %v353, %v499
  %501 = vmatmul.f32.gmra.mxu0 %v390
  %v502 = vpop.f32.mrf.mxu0
  %v503 = vadd.f32 %v353, %v502
  %504 = vmatmul.f32.gmra.mxu0 %v393
  %v505 = vpop.f32.mrf.mxu0
  %v506 = vadd.f32 %v353, %v505
  %507 = vmatmul.f32.gmra.mxu0 %v396
  %v508 = vpop.f32.mrf.mxu0
  %v509 = vadd.f32 %v353, %v508
  %510 = vmatmul.f32.gmra.mxu0 %v399
  %v511 = vpop.f32.mrf.mxu0
  %v512 = vadd.f32 %v353, %v511
  %513 = vmatmul.f32.gmra.mxu0 %v402
  %v514 = vpop.f32.mrf.mxu0
  %v515 = vadd.f32 %v353, %v514
  %516 = vmatmul.f32.gmra.mxu0 %v405
  %v517 = vpop.f32.mrf.mxu0
  %v518 = vadd.f32 %v353, %v517
  %519 = vmatmul.f32.gmra.mxu0 %v408
  %v520 = vpop.f32.mrf.mxu0
  %v521 = vadd.f32 %v353, %v520
  %522 = vmatmul.f32.gmra.mxu0 %v411
  %v523 = vpop.f32.mrf.mxu0
  %v524 = vadd.f32 %v353, %v523
  %525 = vmatmul.f32.gmra.mxu0 %v414
  %v526 = vpop.f32.mrf.mxu0
  %v527 = vadd.f32 %v353, %v526
  %528 = vmatmul.f32.gmra.mxu0 %v417
  %v529 = vpop.f32.mrf.mxu0
  %v530 = vadd.f32 %v353, %v529
  %531 = vmatmul.f32.gmra.mxu0 %v420
  %v532 = vpop.f32.mrf.mxu0
  %v533 = vadd.f32 %v353, %v532
  %534 = vmatmul.f32.gmra.mxu0 %v423
  %v535 = vpop.f32.mrf.mxu0
  %v536 = vadd.f32 %v353, %v535
  %537 = vmatmul.f32.gmra.mxu0 %v426
  %v538 = vpop.f32.mrf.mxu0
  %v539 = vadd.f32 %v353, %v538
  %540 = vmatmul.f32.gmra.mxu0 %v429
  %v541 = vpop.f32.mrf.mxu0
  %v542 = vadd.f32 %v353, %v541
  %543 = vmatmul.f32.gmra.mxu0 %v432
  %v544 = vpop.f32.mrf.mxu0
  %v545 = vadd.f32 %v353, %v544
  %546 = vmatmul.f32.gmra.mxu0 %v435
  %v547 = vpop.f32.mrf.mxu0
  %v548 = vadd.f32 %v353, %v547
  %549 = vmatmul.f32.gmra.mxu0 %v438
  %v550 = vpop.f32.mrf.mxu0
  %v551 = vadd.f32 %v353, %v550
  %552 = vmatmul.f32.gmra.mxu0 %v441
  %v553 = vpop.f32.mrf.mxu0
  %v554 = vadd.f32 %v353, %v553
  %555 = vmatmul.f32.gmra.mxu0 %v444
  %v556 = vpop.f32.mrf.mxu0
  %v557 = vadd.f32 %v353, %v556
  %558 = vmatmul.f32.gmra.mxu0 %v447
  %v559 = vpop.f32.mrf.mxu0
  %v560 = vadd.f32 %v353, %v559
  %561 = vmatmul.f32.gmra.mxu0 %v450
  %v562 = vpop.f32.mrf.mxu0
  %v563 = vadd.f32 %v353, %v562
  %564 = vdwg.mxu0
  %v565 = vtanh.pop %v470
  %v566 = vtanh.pop %v473
  %v567 = vtanh.pop %v476
  %v568 = vtanh.pop %v479
  %v569 = vtanh.pop %v482
  %v570 = vtanh.pop %v485
  %v571 = vtanh.pop %v488
  %v572 = vtanh.pop %v491
  %v573 = vtanh.pop %v494
  %v574 = vtanh.pop %v497
  %v575 = vtanh.pop %v500
  %v576 = vtanh.pop %v503
  %v577 = vtanh.pop %v506
  %v578 = vtanh.pop %v509
  %v579 = vtanh.pop %v512
  %v580 = vtanh.pop %v515
  %v581 = vtanh.pop %v518
  %v582 = vtanh.pop %v521
  %v583 = vtanh.pop %v524
  %v584 = vtanh.pop %v527
  %v585 = vtanh.pop %v530
  %v586 = vtanh.pop %v533
  %v587 = vtanh.pop %v536
  %v588 = vtanh.pop %v539
  %v589 = vtanh.pop %v542
  %v590 = vtanh.pop %v545
  %v591 = vtanh.pop %v548
  %v592 = vtanh.pop %v551
  %v593 = vtanh.pop %v554
  %v594 = vtanh.pop %v557
  %v595 = vtanh.pop %v560
  %v596 = vtanh.pop %v563
  %v597 = vld [vmem:[%s6] sm:$0xff]
  %v598 = vld [vmem:[%s6 + $0x8] sm:$0xff]
  %v599 = vld [vmem:[%s6 + $0x10] sm:$0xff]
  %v600 = vld [vmem:[%s6 + $0x18] sm:$0xff]
  %v601 = vld [vmem:[%s7] sm:$0xff]
  %v602 = vld [vmem:[%s7 + $0x8] sm:$0xff]
  %v604 = vsel %vm76, %v565, 0
  %v607 = vsel %vm76, %v566, 0
  %v610 = vsel %vm76, %v567, 0
  %v613 = vsel %vm76, %v568, 0
  %v616 = vsel %vm76, %v569, 0
  %v619 = vsel %vm76, %v570, 0
  %v622 = vsel %vm76, %v571, 0
  %v625 = vsel %vm76, %v572, 0
  %v628 = vsel %vm76, %v573, 0
  %v631 = vsel %vm76, %v574, 0
  %v634 = vsel %vm76, %v575, 0
  %v637 = vsel %vm76, %v576, 0
  %v640 = vsel %vm76, %v577, 0
  %v643 = vsel %vm76, %v578, 0
  %v646 = vsel %vm76, %v579, 0
  %v649 = vsel %vm76, %v580, 0
  %v652 = vsel %vm76, %v581, 0
  %v655 = vsel %vm76, %v582, 0
  %v658 = vsel %vm76, %v583, 0
  %v661 = vsel %vm76, %v584, 0
  %v664 = vsel %vm76, %v585, 0
  %v667 = vsel %vm76, %v586, 0
  %v670 = vsel %vm76, %v587, 0
  %v673 = vsel %vm76, %v588, 0
  %v676 = vsel %vm76, %v589, 0
  %v679 = vsel %vm76, %v590, 0
  %v682 = vsel %vm76, %v591, 0
  %v685 = vsel %vm76, %v592, 0
  %v688 = vsel %vm76, %v593, 0
  %v691 = vsel %vm76, %v594, 0
  %v694 = vsel %vm76, %v595, 0
  %v697 = vsel %vm76, %v596, 0
  %699 = vmatpush.msra.mxu0 0.0
  %700 = vmatpush.msra.mxu0 0.0
  %701 = vmatpush.msra.mxu0 0.0
  %702 = vmatpush.msra.mxu0 0.0
  %703 = vmatpush.msra.mxu0 0.0
  %704 = vmatpush.msra.mxu0 0.0
  %705 = vmatpush.msra.mxu0 0.0
  %706 = vmatpush.msra.mxu0 0.0
  %707 = vmatpush.msra.mxu0 0.0
  %708 = vmatpush.msra.mxu0 0.0
  %709 = vmatpush.msra.mxu0 0.0
  %710 = vmatpush.msra.mxu0 0.0
  %711 = vmatpush.msra.mxu0 0.0
  %712 = vmatpush.msra.mxu0 0.0
  %713 = vmatpush.msra.mxu0 %v602
  %714 = vmatpush.msra.mxu0 %v601
  %715 = vmatmul.f32.gmra.mxu0 %v604
  %v716 = vpop.f32.mrf.mxu0
  %v717 = vadd.f32 0.0, %v716
  %718 = vmatmul.f32.gmra.mxu0 %v607
  %v719 = vpop.f32.mrf.mxu0
  %v720 = vadd.f32 0.0, %v719
  %721 = vmatmul.f32.gmra.mxu0 %v610
  %v722 = vpop.f32.mrf.mxu0
  %v723 = vadd.f32 0.0, %v722
  %724 = vmatmul.f32.gmra.mxu0 %v613
  %v725 = vpop.f32.mrf.mxu0
  %v726 = vadd.f32 0.0, %v725
  %727 = vmatmul.f32.gmra.mxu0 %v616
  %v728 = vpop.f32.mrf.mxu0
  %v729 = vadd.f32 0.0, %v728
  %730 = vmatmul.f32.gmra.mxu0 %v619
  %v731 = vpop.f32.mrf.mxu0
  %v732 = vadd.f32 0.0, %v731
  %733 = vmatmul.f32.gmra.mxu0 %v622
  %v734 = vpop.f32.mrf.mxu0
  %v735 = vadd.f32 0.0, %v734
  %736 = vmatmul.f32.gmra.mxu0 %v625
  %v737 = vpop.f32.mrf.mxu0
  %v738 = vadd.f32 0.0, %v737
  %739 = vmatmul.f32.gmra.mxu0 %v628
  %v740 = vpop.f32.mrf.mxu0
  %v741 = vadd.f32 0.0, %v740
  %742 = vmatmul.f32.gmra.mxu0 %v631
  %v743 = vpop.f32.mrf.mxu0
  %v744 = vadd.f32 0.0, %v743
  %745 = vmatmul.f32.gmra.mxu0 %v634
  %v746 = vpop.f32.mrf.mxu0
  %v747 = vadd.f32 0.0, %v746
  %748 = vmatmul.f32.gmra.mxu0 %v637
  %v749 = vpop.f32.mrf.mxu0
  %v750 = vadd.f32 0.0, %v749
  %751 = vmatmul.f32.gmra.mxu0 %v640
  %v752 = vpop.f32.mrf.mxu0
  %v753 = vadd.f32 0.0, %v752
  %754 = vmatmul.f32.gmra.mxu0 %v643
  %v755 = vpop.f32.mrf.mxu0
  %v756 = vadd.f32 0.0, %v755
  %757 = vmatmul.f32.gmra.mxu0 %v646
  %v758 = vpop.f32.mrf.mxu0
  %v759 = vadd.f32 0.0, %v758
  %760 = vmatmul.f32.gmra.mxu0 %v649
  %v761 = vpop.f32.mrf.mxu0
  %v762 = vadd.f32 0.0, %v761
  %763 = vmatmul.f32.gmra.mxu0 %v652
  %v764 = vpop.f32.mrf.mxu0
  %v765 = vadd.f32 0.0, %v764
  %766 = vmatmul.f32.gmra.mxu0 %v655
  %v767 = vpop.f32.mrf.mxu0
  %v768 = vadd.f32 0.0, %v767
  %769 = vmatmul.f32.gmra.mxu0 %v658
  %v770 = vpop.f32.mrf.mxu0
  %v771 = vadd.f32 0.0, %v770
  %772 = vmatmul.f32.gmra.mxu0 %v661
  %v773 = vpop.f32.mrf.mxu0
  %v774 = vadd.f32 0.0, %v773
  %775 = vmatmul.f32.gmra.mxu0 %v664
  %v776 = vpop.f32.mrf.mxu0
  %v777 = vadd.f32 0.0, %v776
  %778 = vmatmul.f32.gmra.mxu0 %v667
  %v779 = vpop.f32.mrf.mxu0
  %v780 = vadd.f32 0.0, %v779
  %781 = vmatmul.f32.gmra.mxu0 %v670
  %v782 = vpop.f32.mrf.mxu0
  %v783 = vadd.f32 0.0, %v782
  %784 = vmatmul.f32.gmra.mxu0 %v673
  %v785 = vpop.f32.mrf.mxu0
  %v786 = vadd.f32 0.0, %v785
  %787 = vmatmul.f32.gmra.mxu0 %v676
  %v788 = vpop.f32.mrf.mxu0
  %v789 = vadd.f32 0.0, %v788
  %790 = vmatmul.f32.gmra.mxu0 %v679
  %v791 = vpop.f32.mrf.mxu0
  %v792 = vadd.f32 0.0, %v791
  %793 = vmatmul.f32.gmra.mxu0 %v682
  %v794 = vpop.f32.mrf.mxu0
  %v795 = vadd.f32 0.0, %v794
  %796 = vmatmul.f32.gmra.mxu0 %v685
  %v797 = vpop.f32.mrf.mxu0
  %v798 = vadd.f32 0.0, %v797
  %799 = vmatmul.f32.gmra.mxu0 %v688
  %v800 = vpop.f32.mrf.mxu0
  %v801 = vadd.f32 0.0, %v800
  %802 = vmatmul.f32.gmra.mxu0 %v691
  %v803 = vpop.f32.mrf.mxu0
  %v804 = vadd.f32 0.0, %v803
  %805 = vmatmul.f32.gmra.mxu0 %v694
  %v806 = vpop.f32.mrf.mxu0
  %v807 = vadd.f32 0.0, %v806
  %808 = vmatmul.f32.gmra.mxu0 %v697
  %v809 = vpop.f32.mrf.mxu0
  %v810 = vadd.f32 0.0, %v809
  %811 = vdwg.mxu0
  %vm812 = vcmask 261120
  %v814 = vsel %vm812, %v286, 0
  %v817 = vsel %vm812, %v287, 0
  %v820 = vsel %vm812, %v288, 0
  %v823 = vsel %vm812, %v289, 0
  %v826 = vsel %vm812, %v290, 0
  %v829 = vsel %vm812, %v291, 0
  %v832 = vsel %vm812, %v292, 0
  %v835 = vsel %vm812, %v293, 0
  %v838 = vsel %vm812, %v294, 0
  %v841 = vsel %vm812, %v295, 0
  %v844 = vsel %vm812, %v296, 0
  %v847 = vsel %vm812, %v297, 0
  %v850 = vsel %vm812, %v298, 0
  %v853 = vsel %vm812, %v299, 0
  %v856 = vsel %vm812, %v300, 0
  %v859 = vsel %vm812, %v301, 0
  %v862 = vsel %vm812, %v302, 0
  %v865 = vsel %vm812, %v303, 0
  %v868 = vsel %vm812, %v304, 0
  %v871 = vsel %vm812, %v305, 0
  %v874 = vsel %vm812, %v306, 0
  %v877 = vsel %vm812, %v307, 0
  %v880 = vsel %vm812, %v308, 0
  %v883 = vsel %vm812, %v309, 0
  %v886 = vsel %vm812, %v310, 0
  %v889 = vsel %vm812, %v311, 0
  %v892 = vsel %vm812, %v312, 0
  %v895 = vsel %vm812, %v313, 0
  %v898 = vsel %vm812, %v314, 0
  %v901 = vsel %vm812, %v315, 0
  %v904 = vsel %vm812, %v316, 0
  %v907 = vsel %vm812, %v317, 0
  %909 = vmatpush.msra.mxu0 0.0
  %910 = vmatpush.msra.mxu0 0.0
  %911 = vmatpush.msra.mxu0 0.0
  %912 = vmatpush.msra.mxu0 0.0
  %913 = vmatpush.msra.mxu0 0.0
  %914 = vmatpush.msra.mxu0 0.0
  %915 = vmatpush.msra.mxu0 0.0
  %916 = vmatpush.msra.mxu0 0.0
  %917 = vmatpush.msra.mxu0 0.0
  %918 = vmatpush.msra.mxu0 0.0
  %919 = vmatpush.msra.mxu0 0.0
  %920 = vmatpush.msra.mxu0 0.0
  %921 = vmatpush.msra.mxu0 %v600
  %922 = vmatpush.msra.mxu0 %v599
  %923 = vmatpush.msra.mxu0 %v598
  %924 = vmatpush.msra.mxu0 %v597
  %925 = vmatmul.f32.gmra.mxu0 %v814
  %v926 = vpop.f32.mrf.mxu0
  %v927 = vadd.f32 %v717, %v926
  %928 = vmatmul.f32.gmra.mxu0 %v817
  %v929 = vpop.f32.mrf.mxu0
  %v930 = vadd.f32 %v720, %v929
  %931 = vmatmul.f32.gmra.mxu0 %v820
  %v932 = vpop.f32.mrf.mxu0
  %v933 = vadd.f32 %v723, %v932
  %934 = vmatmul.f32.gmra.mxu0 %v823
  %v935 = vpop.f32.mrf.mxu0
  %v936 = vadd.f32 %v726, %v935
  %937 = vmatmul.f32.gmra.mxu0 %v826
  %v938 = vpop.f32.mrf.mxu0
  %v939 = vadd.f32 %v729, %v938
  %940 = vmatmul.f32.gmra.mxu0 %v829
  %v941 = vpop.f32.mrf.mxu0
  %v942 = vadd.f32 %v732, %v941
  %943 = vmatmul.f32.gmra.mxu0 %v832
  %v944 = vpop.f32.mrf.mxu0
  %v945 = vadd.f32 %v735, %v944
  %946 = vmatmul.f32.gmra.mxu0 %v835
  %v947 = vpop.f32.mrf.mxu0
  %v948 = vadd.f32 %v738, %v947
  %949 = vmatmul.f32.gmra.mxu0 %v838
  %v950 = vpop.f32.mrf.mxu0
  %v951 = vadd.f32 %v741, %v950
  %952 = vmatmul.f32.gmra.mxu0 %v841
  %v953 = vpop.f32.mrf.mxu0
  %v954 = vadd.f32 %v744, %v953
  %955 = vmatmul.f32.gmra.mxu0 %v844
  %v956 = vpop.f32.mrf.mxu0
  %v957 = vadd.f32 %v747, %v956
  %958 = vmatmul.f32.gmra.mxu0 %v847
  %v959 = vpop.f32.mrf.mxu0
  %v960 = vadd.f32 %v750, %v959
  %961 = vmatmul.f32.gmra.mxu0 %v850
  %v962 = vpop.f32.mrf.mxu0
  %v963 = vadd.f32 %v753, %v962
  %964 = vmatmul.f32.gmra.mxu0 %v853
  %v965 = vpop.f32.mrf.mxu0
  %v966 = vadd.f32 %v756, %v965
  %967 = vmatmul.f32.gmra.mxu0 %v856
  %v968 = vpop.f32.mrf.mxu0
  %v969 = vadd.f32 %v759, %v968
  %970 = vmatmul.f32.gmra.mxu0 %v859
  %v971 = vpop.f32.mrf.mxu0
  %v972 = vadd.f32 %v762, %v971
  %973 = vmatmul.f32.gmra.mxu0 %v862
  %v974 = vpop.f32.mrf.mxu0
  %v975 = vadd.f32 %v765, %v974
  %976 = vmatmul.f32.gmra.mxu0 %v865
  %v977 = vpop.f32.mrf.mxu0
  %v978 = vadd.f32 %v768, %v977
  %979 = vmatmul.f32.gmra.mxu0 %v868
  %v980 = vpop.f32.mrf.mxu0
  %v981 = vadd.f32 %v771, %v980
  %982 = vmatmul.f32.gmra.mxu0 %v871
  %v983 = vpop.f32.mrf.mxu0
  %v984 = vadd.f32 %v774, %v983
  %985 = vmatmul.f32.gmra.mxu0 %v874
  %v986 = vpop.f32.mrf.mxu0
  %v987 = vadd.f32 %v777, %v986
  %988 = vmatmul.f32.gmra.mxu0 %v877
  %v989 = vpop.f32.mrf.mxu0
  %v990 = vadd.f32 %v780, %v989
  %991 = vmatmul.f32.gmra.mxu0 %v880
  %v992 = vpop.f32.mrf.mxu0
  %v993 = vadd.f32 %v783, %v992
  %994 = vmatmul.f32.gmra.mxu0 %v883
  %v995 = vpop.f32.mrf.mxu0
  %v996 = vadd.f32 %v786, %v995
  %997 = vmatmul.f32.gmra.mxu0 %v886
  %v998 = vpop.f32.mrf.mxu0
  %v999 = vadd.f32 %v789, %v998
  %1000 = vmatmul.f32.gmra.mxu0 %v889
  %v1001 = vpop.f32.mrf.mxu0
  %v1002 = vadd.f32 %v792, %v1001
  %1003 = vmatmul.f32.gmra.mxu0 %v892
  %v1004 = vpop.f32.mrf.mxu0
  %v1005 = vadd.f32 %v795, %v1004
  %1006 = vmatmul.f32.gmra.mxu0 %v895
  %v1007 = vpop.f32.mrf.mxu0
  %v1008 = vadd.f32 %v798, %v1007
  %1009 = vmatmul.f32.gmra.mxu0 %v898
  %v1010 = vpop.f32.mrf.mxu0
  %v1011 = vadd.f32 %v801, %v1010
  %1012 = vmatmul.f32.gmra.mxu0 %v901
  %v1013 = vpop.f32.mrf.mxu0
  %v1014 = vadd.f32 %v804, %v1013
  %1015 = vmatmul.f32.gmra.mxu0 %v904
  %v1016 = vpop.f32.mrf.mxu0
  %v1017 = vadd.f32 %v807, %v1016
  %1018 = vmatmul.f32.gmra.mxu0 %v907
  %v1019 = vpop.f32.mrf.mxu0
  %v1020 = vadd.f32 %v810, %v1019
  %1021 = vdwg.mxu0
  %v1022 = vld [vmem:[%s8] sm:$0x1]
  %v1024 = vperm.slane %v1022, 0
  %v1026 = vadd.f32 %v927, %v1024
  %v1027 = vadd.f32 %v930, %v1024
  %v1028 = vadd.f32 %v933, %v1024
  %v1029 = vadd.f32 %v936, %v1024
  %v1030 = vadd.f32 %v939, %v1024
  %v1031 = vadd.f32 %v942, %v1024
  %v1032 = vadd.f32 %v945, %v1024
  %v1033 = vadd.f32 %v948, %v1024
  %v1034 = vadd.f32 %v951, %v1024
  %v1035 = vadd.f32 %v954, %v1024
  %v1036 = vadd.f32 %v957, %v1024
  %v1037 = vadd.f32 %v960, %v1024
  %v1038 = vadd.f32 %v963, %v1024
  %v1039 = vadd.f32 %v966, %v1024
  %v1040 = vadd.f32 %v969, %v1024
  %v1041 = vadd.f32 %v972, %v1024
  %v1042 = vadd.f32 %v975, %v1024
  %v1043 = vadd.f32 %v978, %v1024
  %v1044 = vadd.f32 %v981, %v1024
  %v1045 = vadd.f32 %v984, %v1024
  %v1046 = vadd.f32 %v987, %v1024
  %v1047 = vadd.f32 %v990, %v1024
  %v1048 = vadd.f32 %v993, %v1024
  %v1049 = vadd.f32 %v996, %v1024
  %v1050 = vadd.f32 %v999, %v1024
  %v1051 = vadd.f32 %v1002, %v1024
  %v1052 = vadd.f32 %v1005, %v1024
  %v1053 = vadd.f32 %v1008, %v1024
  %v1054 = vadd.f32 %v1011, %v1024
  %v1055 = vadd.f32 %v1014, %v1024
  %v1056 = vadd.f32 %v1017, %v1024
  %v1057 = vadd.f32 %v1020, %v1024
  %v1058 = vtanh.pop %v1026
  %v1059 = vtanh.pop %v1027
  %v1060 = vtanh.pop %v1028
  %v1061 = vtanh.pop %v1029
  %v1062 = vtanh.pop %v1030
  %v1063 = vtanh.pop %v1031
  %v1064 = vtanh.pop %v1032
  %v1065 = vtanh.pop %v1033
  %v1066 = vtanh.pop %v1034
  %v1067 = vtanh.pop %v1035
  %v1068 = vtanh.pop %v1036
  %v1069 = vtanh.pop %v1037
  %v1070 = vtanh.pop %v1038
  %v1071 = vtanh.pop %v1039
  %v1072 = vtanh.pop %v1040
  %v1073 = vtanh.pop %v1041
  %v1074 = vtanh.pop %v1042
  %v1075 = vtanh.pop %v1043
  %v1076 = vtanh.pop %v1044
  %v1077 = vtanh.pop %v1045
  %v1078 = vtanh.pop %v1046
  %v1079 = vtanh.pop %v1047
  %v1080 = vtanh.pop %v1048
  %v1081 = vtanh.pop %v1049
  %v1082 = vtanh.pop %v1050
  %v1083 = vtanh.pop %v1051
  %v1084 = vtanh.pop %v1052
  %v1085 = vtanh.pop %v1053
  %v1086 = vtanh.pop %v1054
  %v1087 = vtanh.pop %v1055
  %v1088 = vtanh.pop %v1056
  %v1089 = vtanh.pop %v1057
  %v1090 = vld [vmem:[%s9] sm:$0xff]
  %v1091 = vld [vmem:[%s9 + $0x8] sm:$0xff]
  %v1092 = vld [vmem:[%s9 + $0x10] sm:$0xff]
  %v1093 = vld [vmem:[%s9 + $0x18] sm:$0xff]
  %v1094 = vld [vmem:[%s10] sm:$0x1]
  %v1096 = vperm.slane %v1094, 0
  %v1099 = vsel %vm812, %v1058, 0
  %v1102 = vsel %vm812, %v1059, 0
  %v1105 = vsel %vm812, %v1060, 0
  %v1108 = vsel %vm812, %v1061, 0
  %v1111 = vsel %vm812, %v1062, 0
  %v1114 = vsel %vm812, %v1063, 0
  %v1117 = vsel %vm812, %v1064, 0
  %v1120 = vsel %vm812, %v1065, 0
  %v1123 = vsel %vm812, %v1066, 0
  %v1126 = vsel %vm812, %v1067, 0
  %v1129 = vsel %vm812, %v1068, 0
  %v1132 = vsel %vm812, %v1069, 0
  %v1135 = vsel %vm812, %v1070, 0
  %v1138 = vsel %vm812, %v1071, 0
  %v1141 = vsel %vm812, %v1072, 0
  %v1144 = vsel %vm812, %v1073, 0
  %v1147 = vsel %vm812, %v1074, 0
  %v1150 = vsel %vm812, %v1075, 0
  %v1153 = vsel %vm812, %v1076, 0
  %v1156 = vsel %vm812, %v1077, 0
  %v1159 = vsel %vm812, %v1078, 0
  %v1162 = vsel %vm812, %v1079, 0
  %v1165 = vsel %vm812, %v1080, 0
  %v1168 = vsel %vm812, %v1081, 0
  %v1171 = vsel %vm812, %v1082, 0
  %v1174 = vsel %vm812, %v1083, 0
  %v1177 = vsel %vm812, %v1084, 0
  %v1180 = vsel %vm812, %v1085, 0
  %v1183 = vsel %vm812, %v1086, 0
  %v1186 = vsel %vm812, %v1087, 0
  %v1189 = vsel %vm812, %v1088, 0
  %v1192 = vsel %vm812, %v1089, 0
  %1194 = vmatpush.msra.mxu0 0.0
  %1195 = vmatpush.msra.mxu0 0.0
  %1196 = vmatpush.msra.mxu0 0.0
  %1197 = vmatpush.msra.mxu0 0.0
  %1198 = vmatpush.msra.mxu0 0.0
  %1199 = vmatpush.msra.mxu0 0.0
  %1200 = vmatpush.msra.mxu0 0.0
  %1201 = vmatpush.msra.mxu0 0.0
  %1202 = vmatpush.msra.mxu0 0.0
  %1203 = vmatpush.msra.mxu0 0.0
  %1204 = vmatpush.msra.mxu0 0.0
  %1205 = vmatpush.msra.mxu0 0.0
  %1206 = vmatpush.msra.mxu0 %v1093
  %1207 = vmatpush.msra.mxu0 %v1092
  %1208 = vmatpush.msra.mxu0 %v1091
  %1209 = vmatpush.msra.mxu0 %v1090
  %1210 = vmatmul.f32.gmra.mxu0 %v1099
  %v1211 = vpop.f32.mrf.mxu0
  %v1212 = vadd.f32 %v1096, %v1211
  %1213 = vmatmul.f32.gmra.mxu0 %v1102
  %v1214 = vpop.f32.mrf.mxu0
  %v1215 = vadd.f32 %v1096, %v1214
  %1216 = vmatmul.f32.gmra.mxu0 %v1105
  %v1217 = vpop.f32.mrf.mxu0
  %v1218 = vadd.f32 %v1096, %v1217
  %1219 = vmatmul.f32.gmra.mxu0 %v1108
  %v1220 = vpop.f32.mrf.mxu0
  %v1221 = vadd.f32 %v1096, %v1220
  %1222 = vmatmul.f32.gmra.mxu0 %v1111
  %v1223 = vpop.f32.mrf.mxu0
  %v1224 = vadd.f32 %v1096, %v1223
  %1225 = vmatmul.f32.gmra.mxu0 %v1114
  %v1226 = vpop.f32.mrf.mxu0
  %v1227 = vadd.f32 %v1096, %v1226
  %1228 = vmatmul.f32.gmra.mxu0 %v1117
  %v1229 = vpop.f32.mrf.mxu0
  %v1230 = vadd.f32 %v1096, %v1229
  %1231 = vmatmul.f32.gmra.mxu0 %v1120
  %v1232 = vpop.f32.mrf.mxu0
  %v1233 = vadd.f32 %v1096, %v1232
  %1234 = vmatmul.f32.gmra.mxu0 %v1123
  %v1235 = vpop.f32.mrf.mxu0
  %v1236 = vadd.f32 %v1096, %v1235
  %1237 = vmatmul.f32.gmra.mxu0 %v1126
  %v1238 = vpop.f32.mrf.mxu0
  %v1239 = vadd.f32 %v1096, %v1238
  %1240 = vmatmul.f32.gmra.mxu0 %v1129
  %v1241 = vpop.f32.mrf.mxu0
  %v1242 = vadd.f32 %v1096, %v1241
  %1243 = vmatmul.f32.gmra.mxu0 %v1132
  %v1244 = vpop.f32.mrf.mxu0
  %v1245 = vadd.f32 %v1096, %v1244
  %1246 = vmatmul.f32.gmra.mxu0 %v1135
  %v1247 = vpop.f32.mrf.mxu0
  %v1248 = vadd.f32 %v1096, %v1247
  %1249 = vmatmul.f32.gmra.mxu0 %v1138
  %v1250 = vpop.f32.mrf.mxu0
  %v1251 = vadd.f32 %v1096, %v1250
  %1252 = vmatmul.f32.gmra.mxu0 %v1141
  %v1253 = vpop.f32.mrf.mxu0
  %v1254 = vadd.f32 %v1096, %v1253
  %1255 = vmatmul.f32.gmra.mxu0 %v1144
  %v1256 = vpop.f32.mrf.mxu0
  %v1257 = vadd.f32 %v1096, %v1256
  %1258 = vmatmul.f32.gmra.mxu0 %v1147
  %v1259 = vpop.f32.mrf.mxu0
  %v1260 = vadd.f32 %v1096, %v1259
  %1261 = vmatmul.f32.gmra.mxu0 %v1150
  %v1262 = vpop.f32.mrf.mxu0
  %v1263 = vadd.f32 %v1096, %v1262
  %1264 = vmatmul.f32.gmra.mxu0 %v1153
  %v1265 = vpop.f32.mrf.mxu0
  %v1266 = vadd.f32 %v1096, %v1265
  %1267 = vmatmul.f32.gmra.mxu0 %v1156
  %v1268 = vpop.f32.mrf.mxu0
  %v1269 = vadd.f32 %v1096, %v1268
  %1270 = vmatmul.f32.gmra.mxu0 %v1159
  %v1271 = vpop.f32.mrf.mxu0
  %v1272 = vadd.f32 %v1096, %v1271
  %1273 = vmatmul.f32.gmra.mxu0 %v1162
  %v1274 = vpop.f32.mrf.mxu0
  %v1275 = vadd.f32 %v1096, %v1274
  %1276 = vmatmul.f32.gmra.mxu0 %v1165
  %v1277 = vpop.f32.mrf.mxu0
  %v1278 = vadd.f32 %v1096, %v1277
  %1279 = vmatmul.f32.gmra.mxu0 %v1168
  %v1280 = vpop.f32.mrf.mxu0
  %v1281 = vadd.f32 %v1096, %v1280
  %1282 = vmatmul.f32.gmra.mxu0 %v1171
  %v1283 = vpop.f32.mrf.mxu0
  %v1284 = vadd.f32 %v1096, %v1283
  %1285 = vmatmul.f32.gmra.mxu0 %v1174
  %v1286 = vpop.f32.mrf.mxu0
  %v1287 = vadd.f32 %v1096, %v1286
  %1288 = vmatmul.f32.gmra.mxu0 %v1177
  %v1289 = vpop.f32.mrf.mxu0
  %v1290 = vadd.f32 %v1096, %v1289
  %1291 = vmatmul.f32.gmra.mxu0 %v1180
  %v1292 = vpop.f32.mrf.mxu0
  %v1293 = vadd.f32 %v1096, %v1292
  %1294 = vmatmul.f32.gmra.mxu0 %v1183
  %v1295 = vpop.f32.mrf.mxu0
  %v1296 = vadd.f32 %v1096, %v1295
  %1297 = vmatmul.f32.gmra.mxu0 %v1186
  %v1298 = vpop.f32.mrf.mxu0
  %v1299 = vadd.f32 %v1096, %v1298
  %1300 = vmatmul.f32.gmra.mxu0 %v1189
  %v1301 = vpop.f32.mrf.mxu0
  %v1302 = vadd.f32 %v1096, %v1301
  %1303 = vmatmul.f32.gmra.mxu0 %v1192
  %v1304 = vpop.f32.mrf.mxu0
  %v1305 = vadd.f32 %v1096, %v1304
  %1306 = vdwg.mxu0
  %v1307 = vand.u32 2147483647, %v1212
  %v1308 = vand.u32 2147483647, %v1215
  %v1309 = vand.u32 2147483647, %v1218
  %v1310 = vand.u32 2147483647, %v1221
  %v1311 = vand.u32 2147483647, %v1224
  %v1312 = vand.u32 2147483647, %v1227
  %v1313 = vand.u32 2147483647, %v1230
  %v1314 = vand.u32 2147483647, %v1233
  %v1315 = vand.u32 2147483647, %v1236
  %v1316 = vand.u32 2147483647, %v1239
  %v1317 = vand.u32 2147483647, %v1242
  %v1318 = vand.u32 2147483647, %v1245
  %v1319 = vand.u32 2147483647, %v1248
  %v1320 = vand.u32 2147483647, %v1251
  %v1321 = vand.u32 2147483647, %v1254
  %v1322 = vand.u32 2147483647, %v1257
  %v1323 = vand.u32 2147483647, %v1260
  %v1324 = vand.u32 2147483647, %v1263
  %v1325 = vand.u32 2147483647, %v1266
  %v1326 = vand.u32 2147483647, %v1269
  %v1327 = vand.u32 2147483647, %v1272
  %v1328 = vand.u32 2147483647, %v1275
  %v1329 = vand.u32 2147483647, %v1278
  %v1330 = vand.u32 2147483647, %v1281
  %v1331 = vand.u32 2147483647, %v1284
  %v1332 = vand.u32 2147483647, %v1287
  %v1333 = vand.u32 2147483647, %v1290
  %v1334 = vand.u32 2147483647, %v1293
  %v1335 = vand.u32 2147483647, %v1296
  %v1336 = vand.u32 2147483647, %v1299
  %v1337 = vand.u32 2147483647, %v1302
  %v1338 = vand.u32 2147483647, %v1305
  %vm1339 = vcmask 31744
  %1340 = vst.msk [vmem:[%s11] sm:$0xff] %vm1339, %v1307
  %1341 = vst.msk [vmem:[%s11 + $0x8] sm:$0xff] %vm1339, %v1308
  %1342 = vst.msk [vmem:[%s11 + $0x10] sm:$0xff] %vm1339, %v1309
  %1343 = vst.msk [vmem:[%s11 + $0x18] sm:$0xff] %vm1339, %v1310
  %1344 = vst.msk [vmem:[%s11 + $0x20] sm:$0xff] %vm1339, %v1311
  %1345 = vst.msk [vmem:[%s11 + $0x28] sm:$0xff] %vm1339, %v1312
  %1346 = vst.msk [vmem:[%s11 + $0x30] sm:$0xff] %vm1339, %v1313
  %1347 = vst.msk [vmem:[%s11 + $0x38] sm:$0xff] %vm1339, %v1314
  %1348 = vst.msk [vmem:[%s11 + $0x40] sm:$0xff] %vm1339, %v1315
  %1349 = vst.msk [vmem:[%s11 + $0x48] sm:$0xff] %vm1339, %v1316
  %1350 = vst.msk [vmem:[%s11 + $0x50] sm:$0xff] %vm1339, %v1317
  %1351 = vst.msk [vmem:[%s11 + $0x58] sm:$0xff] %vm1339, %v1318
  %1352 = vst.msk [vmem:[%s11 + $0x60] sm:$0xff] %vm1339, %v1319
  %1353 = vst.msk [vmem:[%s11 + $0x68] sm:$0xff] %vm1339, %v1320
  %1354 = vst.msk [vmem:[%s11 + $0x70] sm:$0xff] %vm1339, %v1321
  %1355 = vst.msk [vmem:[%s11 + $0x78] sm:$0xff] %vm1339, %v1322
  %1356 = vst.msk [vmem:[%s11 + $0x80] sm:$0xff] %vm1339, %v1323
  %1357 = vst.msk [vmem:[%s11 + $0x88] sm:$0xff] %vm1339, %v1324
  %1358 = vst.msk [vmem:[%s11 + $0x90] sm:$0xff] %vm1339, %v1325
  %1359 = vst.msk [vmem:[%s11 + $0x98] sm:$0xff] %vm1339, %v1326
  %1360 = vst.msk [vmem:[%s11 + $0xa0] sm:$0xff] %vm1339, %v1327
  %1361 = vst.msk [vmem:[%s11 + $0xa8] sm:$0xff] %vm1339, %v1328
  %1362 = vst.msk [vmem:[%s11 + $0xb0] sm:$0xff] %vm1339, %v1329
  %1363 = vst.msk [vmem:[%s11 + $0xb8] sm:$0xff] %vm1339, %v1330
  %1364 = vst.msk [vmem:[%s11 + $0xc0] sm:$0xff] %vm1339, %v1331
  %1365 = vst.msk [vmem:[%s11 + $0xc8] sm:$0xff] %vm1339, %v1332
  %1366 = vst.msk [vmem:[%s11 + $0xd0] sm:$0xff] %vm1339, %v1333
  %1367 = vst.msk [vmem:[%s11 + $0xd8] sm:$0xff] %vm1339, %v1334
  %1368 = vst.msk [vmem:[%s11 + $0xe0] sm:$0xff] %vm1339, %v1335
  %1369 = vst.msk [vmem:[%s11 + $0xe8] sm:$0xff] %vm1339, %v1336
  %1370 = vst.msk [vmem:[%s11 + $0xf0] sm:$0xff] %vm1339, %v1337
  %1371 = vst.msk [vmem:[%s11 + $0xf8] sm:$0xff] %vm1339, %v1338
  // Predicated region
  $region46: #{tpu_custom_call.1} parent=0 // pred_check
    _
  $region47: #{tpu_custom_call.1} parent=0 // pred_check_branch
    %1373 = sbr.rel (0) target = $region49
  $region48: #{tpu_custom_call.1} parent=0 // pred_region
    _
  $region49: #{tpu_custom_call.1} parent=0 // pred_fallthru
    _
  // Predicated region
  $region50: #{tpu_custom_call.1} parent=0 // pred_check
    _
  $region51: #{tpu_custom_call.1} parent=0 // pred_check_branch
    %1375 = sbr.rel (0) target = $region53
  $region52: #{tpu_custom_call.1} parent=0 // pred_region
    _
  $region53: #{tpu_custom_call.1} parent=0 // pred_fallthru
    _

</llo_original>
